<compile_context>
chip_gen: v6e
topology: v6e:2x2x1
jax: 0.10.0
libtpu: 0.0.40
codegen_flags: <defaults>
</compile_context>

<pallas_src>
import functools

import jax
import jax.numpy as jnp
from jax.experimental import pallas as pl
from jax.experimental.pallas import tpu as pltpu


def _self_attn_kernel(*refs, has_mask):
    # refs (has_mask=True):  x, query, mask, pooled_out, attn_out
    # refs (has_mask=False): x, query,       pooled_out, attn_out
    if has_mask:
        x_ref, q_ref, mask_ref, pooled_ref, attn_ref = refs
    else:
        x_ref, q_ref, pooled_ref, attn_ref = refs
        mask_ref = None

    BB, T, H = x_ref.shape
    x = x_ref[...]                                    # stored dtype (f32/bf16)
    q = q_ref[...].astype(x.dtype).reshape(1, 1, H)   # (1, 1, H), tiny

    # ---- scores = <x, query> over H --------------------------------------
    # Multiply in the stored dtype (native bf16 VALU on v6e/v7x), accumulate
    # the lane reduction in f32.  Pure VPU/XLU work; MXU stays idle (kernel is
    # HBM-bound, M=1 matmuls only serialize).
    scores = jnp.sum(x * q, axis=-1, dtype=jnp.float32)        # (BB, T)

    # ---- masked_fill(mask == False, -inf) ---------------------------------
    if has_mask:
        keep = mask_ref[...] != 0                               # (BB, T)
        scores = jnp.where(keep, scores, -jnp.inf)

    # ---- softmax over T (numerically stable).  Fully-masked rows yield NaN,
    #      matching torch's masked_fill + softmax behavior (intentional). ----
    m = jnp.max(scores, axis=-1, keepdims=True)                 # (BB, 1)
    e = jnp.exp(scores - m)                                     # (BB, T)
    s = jnp.sum(e, axis=-1, keepdims=True)                      # (BB, 1)
    # f32 outputs get the exact reciprocal; sub-f32 outputs can't resolve the
    # ~1e-4 error of the EUP approx path, so take the free slot there.
    approx = x.dtype != jnp.float32
    w = e * pl.reciprocal(s, approx=approx)                     # (BB, T), f32

    # ---- pooled = sum_t w * x  (f32 weights, f32 accumulation) -----------
    pooled = jnp.sum(w[:, :, None] * x, axis=1, dtype=jnp.float32)   # (BB, H)

    pooled_ref[...] = pooled.astype(pooled_ref.dtype)
    attn_ref[...] = w.astype(attn_ref.dtype)


def _vmem_capacity_bytes():
    """Per-core VMEM capacity; conservative fallback (v7x = 64 MiB/TC)."""
    try:
        return int(pltpu.get_tpu_info().vmem_capacity_bytes)
    except Exception:
        return 64 << 20


def _choose_block_batch(B, T, H, itemsize, vmem_budget_bytes):
    """Batch rows per block: >=4 grid steps when possible, VMEM-safe."""
    # bb sits on the sublane axis of the 2-D (bb, T)/(bb, H) mask/output
    # blocks: 8-aligned for 32-bit, 16-aligned for packed sub-f32 dtypes.
    align = 16 if itemsize < 4 else 8

    # Per batch-row VMEM cost of one pipelined block:
    #   * double-buffered x tile (stored dtype)
    #   * ~2 full-tile f32 elementwise temporaries (x*q product, w*x product)
    #   * double-buffered int32 mask and f32-sized outputs
    per_row = (2 * T * H * itemsize
               + 2 * T * H * 4
               + 2 * T * 4
               + 2 * (T + H) * 4)
    bb_max = max(1, vmem_budget_bytes // per_row)

    if B <= align:
        # Too small to split without breaking sublane alignment; one block.
        return B

    # Aim for ~4 grid steps (pipelining + v7x megacore), clipped by VMEM.
    target = max(align, (B + 3) // 4)
    bb = min(bb_max, target)
    bb = max(align, (bb // align) * align)
    # TODO(synk): flash-style online-softmax T-tiling when even one aligned
    # row-group of (T, H) exceeds the VMEM budget (extreme T*H).
    return min(bb, B)


def self_attention_pallas(x, query, attention_mask=None, output_attentions=False):
    """x: (B, T, H); query: (1, H); attention_mask: (B, T) bool/int or None.

    Returns (pooled,) or (pooled, attn) with pooled (B, H) and attn (B, T, 1),
    matching the torch module.
    """
    B, T, H = x.shape
    has_mask = attention_mask is not None

    itemsize = jnp.dtype(x.dtype).itemsize
    vmem_cap = _vmem_capacity_bytes()
    vmem_limit = min(int(vmem_cap * 3 // 4), 96 << 20)   # headroom for compiler
    bb = _choose_block_batch(B, T, H, itemsize, vmem_budget_bytes=vmem_limit // 2)
    grid = (pl.cdiv(B, bb),)   # ragged last block handled by masked DMA

    # Advisory cost estimate (fixed bytes_accessed formula).
    bytes_accessed = (B * T * H * itemsize      # x read
                      + H * itemsize            # query read
                      + B * H * itemsize        # pooled write
                      + B * T * itemsize)       # attn write
    if has_mask:
        bytes_accessed += B * T * 4             # int32 mask read
    cost = pl.CostEstimate(
        flops=4 * B * T * H + 6 * B * T,
        transcendentals=B * T + B,
        bytes_accessed=bytes_accessed,
    )

    in_specs = [
        pl.BlockSpec((bb, T, H), lambda b: (b, 0, 0)),      # x
        pl.BlockSpec((1, H), lambda b: (0, 0)),             # query (shared)
    ]
    args = [x, query]
    if has_mask:
        in_specs.append(pl.BlockSpec((bb, T), lambda b: (b, 0)))  # mask
        args.append(attention_mask.astype(jnp.int32))

    grid_spec = pltpu.PrefetchScalarGridSpec(
        num_scalar_prefetch=0,
        grid=grid,
        in_specs=in_specs,
        out_specs=[
            pl.BlockSpec((bb, H), lambda b: (b, 0)),        # pooled (lane-dense H)
            pl.BlockSpec((bb, T), lambda b: (b, 0)),        # attention weights
        ],
    )

    pooled, attn = pl.pallas_call(
        functools.partial(_self_attn_kernel, has_mask=has_mask),
        out_shape=(
            jax.ShapeDtypeStruct((B, H), x.dtype),
            jax.ShapeDtypeStruct((B, T), x.dtype),
        ),
        grid_spec=grid_spec,
        compiler_params=pltpu.CompilerParams(
            dimension_semantics=("parallel",),
            vmem_limit_bytes=vmem_limit,
        ),
        cost_estimate=cost,
    )(*args)

    attn = attn[..., None]  # (B, T, 1), matching torch's unsqueeze(-1)
    return (pooled, attn) if output_attentions else (pooled,)


def _reference(x, query, attention_mask=None):
    scores = jnp.einsum("bth,oh->bt", x, query)
    if attention_mask is not None:
        scores = jnp.where(attention_mask, scores, -jnp.inf)
    w = jax.nn.softmax(scores, axis=-1)[..., None]
    pooled = jnp.sum(w * x, axis=1)
    return pooled, w


if __name__ == "__main__":
    key = jax.random.PRNGKey(0)
    B, T, H = 2, 8, 32

    # Deterministic parameter init, exactly as in the module: query = ones(1, H)
    query = jnp.ones((1, H), dtype=jnp.float32)

    kx, km, kx2, km2 = jax.random.split(key, 4)

    # --- tiny case (B <= 8: single block), f32, with mask -------------------
    x = jax.random.normal(kx, (B, T, H), dtype=jnp.float32)
    # Keep at least one valid position per row so the reference has no NaNs.
    attention_mask = (jax.random.uniform(km, (B, T)) > 0.2).at[:, 0].set(True)

    pooled, attn = self_attention_pallas(
        x, query, attention_mask=attention_mask, output_attentions=True)
    jax.block_until_ready((pooled, attn))
    ref_pooled, ref_attn = _reference(x, query, attention_mask)
    assert pooled.shape == (B, H)
    assert attn.shape == (B, T, 1)
    assert jnp.allclose(pooled, ref_pooled, atol=1e-5, rtol=1e-5)
    assert jnp.allclose(attn, ref_attn, atol=1e-5, rtol=1e-5)

    # --- no-mask specialization (mask input/DMA dropped entirely) -----------
    (pooled_nm,) = self_attention_pallas(x, query)
    jax.block_until_ready(pooled_nm)
    ref_nm, _ = _reference(x, query, None)
    assert jnp.allclose(pooled_nm, ref_nm, atol=1e-5, rtol=1e-5)

    # --- multi-step grid + ragged last block (B=20 -> blocks of 8,8,4) ------
    B2 = 20
    x2 = jax.random.normal(kx2, (B2, T, H), dtype=jnp.float32)
    mask2 = (jax.random.uniform(km2, (B2, T)) > 0.2).at[:, 0].set(True)
    pooled2, attn2 = self_attention_pallas(
        x2, query, attention_mask=mask2, output_attentions=True)
    jax.block_until_ready((pooled2, attn2))
    ref_p2, ref_a2 = _reference(x2, query, mask2)
    assert jnp.allclose(pooled2, ref_p2, atol=1e-5, rtol=1e-5)
    assert jnp.allclose(attn2, ref_a2, atol=1e-5, rtol=1e-5)

    # --- bf16 inputs: VPU multiply in bf16, f32 accumulation (no MXU) -------
    xb = x2.astype(jnp.bfloat16)
    qb = query.astype(jnp.bfloat16)
    pooled_b, attn_b = self_attention_pallas(
        xb, qb, attention_mask=mask2, output_attentions=True)
    jax.block_until_ready((pooled_b, attn_b))
    ref_pb, ref_ab = _reference(
        xb.astype(jnp.float32), qb.astype(jnp.float32), mask2)
    assert jnp.allclose(pooled_b.astype(jnp.float32), ref_pb, atol=2e-2, rtol=2e-2)
    assert jnp.allclose(attn_b.astype(jnp.float32), ref_ab, atol=2e-2, rtol=2e-2)

    print("KERNEL_OK")
</pallas_src>

<mosaic_0001>
module attributes {stable_mosaic.version = 11 : i64} {
  func.func @_self_attn_kernel(%arg0: i32, %arg1: memref<2x8x32xf32, #tpu.memory_space<vmem>>, %arg2: memref<1x32xf32, #tpu.memory_space<vmem>>, %arg3: memref<2x8xi32, #tpu.memory_space<vmem>>, %arg4: memref<2x32xf32, #tpu.memory_space<vmem>>, %arg5: memref<2x8xf32, #tpu.memory_space<vmem>>) attributes {dimension_semantics = [#tpu.dimension_semantics<parallel>], iteration_bounds = array<i64: 1>, scalar_prefetch = 0 : i64, scratch_operands = 0 : i64, tpu.core_type = #tpu.core_type<tc>, window_params = [{transform_indices = @transform_0, window_bounds = array<i64: 2, 8, 32>}, {pipeline_mode = #tpu.pipeline_mode<synchronous>, transform_indices = @transform_1, window_bounds = array<i64: 1, 32>}, {transform_indices = @transform_2, window_bounds = array<i64: 2, 8>}, {transform_indices = @transform_3, window_bounds = array<i64: 2, 32>}, {transform_indices = @transform_4, window_bounds = array<i64: 2, 8>}]} {
    %c0 = arith.constant 0 : index
    %c0_0 = arith.constant 0 : index
    %c0_1 = arith.constant 0 : index
    %0 = vector.load %arg1[%c0, %c0_0, %c0_1] : memref<2x8x32xf32, #tpu.memory_space<vmem>>, vector<2x8x32xf32>
    %c0_2 = arith.constant 0 : index
    %c0_3 = arith.constant 0 : index
    %1 = vector.load %arg2[%c0_2, %c0_3] : memref<1x32xf32, #tpu.memory_space<vmem>>, vector<1x32xf32>
    %2 = vector.shape_cast %1 : vector<1x32xf32> to vector<1x1x32xf32>
    %3 = vector.broadcast %2 : vector<1x1x32xf32> to vector<2x8x32xf32>
    %4 = arith.mulf %0, %3 : vector<2x8x32xf32>
    %cst = arith.constant dense<0.000000e+00> : vector<2x8xf32>
    %5 = vector.multi_reduction <add>, %4, %cst [2] : vector<2x8x32xf32> to vector<2x8xf32>
    %c0_4 = arith.constant 0 : index
    %c0_5 = arith.constant 0 : index
    %6 = vector.load %arg3[%c0_4, %c0_5] : memref<2x8xi32, #tpu.memory_space<vmem>>, vector<2x8xi32>
    %c0_i32 = arith.constant 0 : i32
    %7 = vector.broadcast %c0_i32 : i32 to vector<2x8xi32>
    %8 = arith.cmpi ne, %6, %7 : vector<2x8xi32>
    %cst_6 = arith.constant 0xFF800000 : f32
    %9 = vector.broadcast %cst_6 : f32 to vector<2x8xf32>
    %10 = arith.select %8, %5, %9 : vector<2x8xi1>, vector<2x8xf32>
    %cst_7 = arith.constant dense<0xFF800000> : vector<2xf32>
    %11 = vector.multi_reduction <maximumf>, %10, %cst_7 [1] : vector<2x8xf32> to vector<2xf32>
    %12 = vector.shape_cast %11 : vector<2xf32> to vector<2x1xf32>
    %13 = vector.broadcast %12 : vector<2x1xf32> to vector<2x8xf32>
    %14 = arith.subf %10, %13 : vector<2x8xf32>
    %15 = math.exp %14 : vector<2x8xf32>
    %cst_8 = arith.constant dense<0.000000e+00> : vector<2xf32>
    %16 = vector.multi_reduction <add>, %15, %cst_8 [1] : vector<2x8xf32> to vector<2xf32>
    %17 = vector.shape_cast %16 : vector<2xf32> to vector<2x1xf32>
    %18 = tpu.reciprocal %17 : vector<2x1xf32> -> vector<2x1xf32>
    %19 = vector.broadcast %18 : vector<2x1xf32> to vector<2x8xf32>
    %20 = arith.mulf %15, %19 : vector<2x8xf32>
    %21 = vector.shape_cast %20 : vector<2x8xf32> to vector<2x8x1xf32>
    %22 = vector.broadcast %21 : vector<2x8x1xf32> to vector<2x8x32xf32>
    %23 = arith.mulf %22, %0 : vector<2x8x32xf32>
    %cst_9 = arith.constant dense<0.000000e+00> : vector<2x32xf32>
    %24 = vector.multi_reduction <add>, %23, %cst_9 [1] : vector<2x8x32xf32> to vector<2x32xf32>
    %c0_10 = arith.constant 0 : index
    %c0_11 = arith.constant 0 : index
    %25 = vector.load %arg4[%c0_10, %c0_11] : memref<2x32xf32, #tpu.memory_space<vmem>>, vector<2x32xf32>
    tpu.vector_store %arg4[%c0_10, %c0_11], %24 {strides = array<i32>} : memref<2x32xf32, #tpu.memory_space<vmem>>, vector<2x32xf32>,
    %c0_12 = arith.constant 0 : index
    %c0_13 = arith.constant 0 : index
    %26 = vector.load %arg5[%c0_12, %c0_13] : memref<2x8xf32, #tpu.memory_space<vmem>>, vector<2x8xf32>
    tpu.vector_store %arg5[%c0_12, %c0_13], %20 {strides = array<i32>} : memref<2x8xf32, #tpu.memory_space<vmem>>, vector<2x8xf32>,
    return
  }
  func.func @transform_0(%arg0: i32) -> (i32, i32, i32) {
    %c0_i32 = arith.constant 0 : i32
    %c0_i32_0 = arith.constant 0 : i32
    %c0_i32_1 = arith.constant 0 : i32
    return %arg0, %c0_i32, %c0_i32_0 : i32, i32, i32
  }
  func.func @transform_1(%arg0: i32) -> (i32, i32) {
    %c0_i32 = arith.constant 0 : i32
    %c0_i32_0 = arith.constant 0 : i32
    %c0_i32_1 = arith.constant 0 : i32
    return %c0_i32, %c0_i32_0 : i32, i32
  }
  func.func @transform_2(%arg0: i32) -> (i32, i32) {
    %c0_i32 = arith.constant 0 : i32
    %c0_i32_0 = arith.constant 0 : i32
    return %arg0, %c0_i32 : i32, i32
  }
  func.func @transform_3(%arg0: i32) -> (i32, i32) {
    %c0_i32 = arith.constant 0 : i32
    %c0_i32_0 = arith.constant 0 : i32
    return %arg0, %c0_i32 : i32, i32
  }
  func.func @transform_4(%arg0: i32) -> (i32, i32) {
    %c0_i32 = arith.constant 0 : i32
    %c0_i32_0 = arith.constant 0 : i32
    return %arg0, %c0_i32 : i32, i32
  }
}

</mosaic_0001>

<llo_original>
// kernel: tpu_custom_call.1
$region0: #{tpu_custom_call.1}
  #allocation0 [shape = 'u32[]', space=smem, size = 0x4, offset = 0x4, fixed_abs, tag = 'smem constant byte address 0x4 - core index']
  #allocation1 [shape = 'u32[144,128]{1,0:T(1,128)}', space=vmem, size = 0x12000, scoped, tag = 'internal scratch']
  %s0 = inlined_call_operand.hbm [shape: f32[2,8,32], index: 0, kind: input, shape index: {}]
  %s1 = inlined_call_operand.vmem [shape: f32[1,32], index: 1, kind: input, shape index: {}]
  %s2 = inlined_call_operand.vmem [shape: s32[2,8], index: 2, kind: input, shape index: {}]
  %s3 = inlined_call_operand.hbm [shape: f32[2,32], index: 3, kind: output, shape index: {0}]
  %s4 = inlined_call_operand.hbm [shape: f32[2,8], index: 4, kind: output, shape index: {1}]
  %5 = xla_tuple %s3, %s4
  %s6 = sld [smem:[#allocation0]]
  $region34: #{tpu_custom_call.1} parent=0
    _
  %s8 = ssub.s32 1, %s6
  %s9 = scalar_select 0, %s8, %s6
  $region1: #{tpu_custom_call.1} parent=0
    #allocation2 [shape = 'u8[8192]{0}', space=vmem, size = 0x2000, scoped, tag = 'input window, operand 0, single buffered']
    #allocation3 [shape = 's32[1]{0}', space=sflag, size = 0x4, scoped, tag = 'scoped memory for tpu_custom_call.1']
    #allocation4 [shape = 's32[1]{0}', space=sflag, size = 0x4, scoped, tag = 'scoped memory for tpu_custom_call.1']
    #allocation5 [shape = 'u8[1024]{0}', space=vmem, size = 0x400, scoped, tag = 'output window, operand 0, single buffered']
    #allocation6 [shape = 'u8[1024]{0}', space=vmem, size = 0x400, scoped, tag = 'output window, operand 1, single buffered']
    #allocation7 [shape = 's32[1]{0}', space=sflag, size = 0x4, scoped, tag = 'scoped memory for tpu_custom_call.1']
    %10 = vsyncpa [#allocation3], 0
    %11 = vsyncpa [#allocation4], 0
    %12 = vsyncpa [#allocation7], 0
    // Predicated region
    $region2: #{tpu_custom_call.1} parent=1 // pred_check
      _
    $region3: #{tpu_custom_call.1} parent=1 // pred_check_branch
      %14 = sbr.rel (0) target = $region5
    $region4: #{tpu_custom_call.1} parent=1 // pred_region
      %s16 = ssub.s32 256, 256
      %17 = vsyncadd [#allocation3], %s16
      %s18 = sshll.u32 [#allocation2], 4
      %s19 = int_to_ptr.vmem [resolvable:$true] %s18
      %24 = dma.hbm_to_vmem [thread:$0]  %s0, 256, %s19, [#allocation3], 128, 128, 8
    $region5: #{tpu_custom_call.1} parent=1 // pred_fallthru
      _
    // Predicated region
    $region6: #{tpu_custom_call.1} parent=1 // pred_check
      _
    $region7: #{tpu_custom_call.1} parent=1 // pred_check_branch
      %26 = sbr.rel (0) target = $region9
    $region8: #{tpu_custom_call.1} parent=1 // pred_region
      _
    $region9: #{tpu_custom_call.1} parent=1 // pred_fallthru
      _
    // Predicated region
    $region10: #{tpu_custom_call.1} parent=1 // pred_check
      _
    $region11: #{tpu_custom_call.1} parent=1 // pred_check_branch
      %28 = sbr.rel (0) target = $region13
    $region12: #{tpu_custom_call.1} parent=1 // pred_region
      _
    $region13: #{tpu_custom_call.1} parent=1 // pred_fallthru
      _
    // Predicated region
    $region14: #{tpu_custom_call.1} parent=1 // pred_check
      _
    $region15: #{tpu_custom_call.1} parent=1 // pred_check_branch
      %30 = sbr.rel (0) target = $region17
    $region16: #{tpu_custom_call.1} parent=1 // pred_region
      %31 = dma.done [#allocation3], 256
    $region17: #{tpu_custom_call.1} parent=1 // pred_fallthru
      _
    %v32 = vld [vmem:[#allocation2] sm:$0xff]
    %v33 = vld [vmem:[#allocation2 + $0x8] sm:$0xff]
    %v34 = vld [vmem:[%s1] sm:$0x1]
    %v36 = vlaneseq
    %v37 = vshrl.u32 %v36, 7
    %v38 = vsub.s32 0, %v37
    %v39 = vrot.slane %v34, %v38
    %v41 = vmul.f32 %v32, %v39
    %v42 = vmul.f32 %v33, %v39
    %vm43 = vcmask 261120
    %v44 = vsel %vm43, %v41, 0.0
    %45 = vadd.xlane.f32.xlu0 %v44
    %v46 = vpop.xlane.xlu0 %45
    %v47 = vsel %vm43, %v42, 0.0
    %48 = vadd.xlane.f32.xlu0 %v47
    %v49 = vpop.xlane.xlu0 %48
    %v50 = vld [vmem:[%s2] sm:$0x3]
    %vm51 = vcmp.ne.s32.totalorder %v50, 0
    %v54 = vlaneseq
    %v55 = vand.u32 %v54, 127
    %v56 = vlaneseq
    %v57 = vshrl.u32 %v56, 7
    %v58 = vsub.s32 %v55, %v57
    %v59 = vrot.slane %v46, %v58
    %v60 = vlaneseq
    %v61 = vshrl.u32 %v60, 7
    %v62 = vsub.s32 %v55, %v61
    %v63 = vrot.slane %v49, %v62
    %vm64 = vcmask 1041409
    %v65 = vsel %vm64, %v63, %v59
    %v67 = vsel %vm51, %v65, -inf
    %vm68 = vcmask 58368
    %v69 = vsel %vm68, %v67, -inf
    %70 = vmax.xlane.f32.xlu0 %v69
    %v71 = vpop.xlane.xlu0 %70
    %v72 = vsub.f32 %v67, %v71
    %v73 = vmul.f32 %v72, 1.442695
    %v74 = vpow.pop %v73
    %v75 = vsel %vm68, %v74, 0.0
    %76 = vadd.xlane.f32.xlu0 %v75
    %v77 = vpop.xlane.xlu0 %76
    %v78 = vrcp.pop %v77
    %v79 = vmul.f32 %v74, %v78
    %v80 = vlaneseq
    %v81 = vshrl.u32 %v80, 7
    %v82 = vsub.s32 0, %v81
    %v83 = vrot.slane %v79, %v82
    %85 = vbcast.lane.b32.xlu0 %v83, 256
    %v86 = vpop.permute.xlu0 %85
    %v87 = vlaneseq
    %v88 = vshrl.u32 %v87, 7
    %v89 = vsub.s32 1, %v88
    %v90 = vrot.slane %v79, %v89
    %92 = vbcast.lane.b32.xlu0 %v90, 256
    %v93 = vpop.permute.xlu0 %92
    %v94 = vmul.f32 %v86, %v32
    %v95 = vmul.f32 %v93, %v33
    %v96 = vsel %vm43, %v94, 0.0
    %v97 = vrot.slane %v96, 4
    %v98 = vadd.f32 %v96, %v97
    %v99 = vrot.slane %v98, 2
    %v100 = vadd.f32 %v98, %v99
    %v101 = vrot.slane %v100, 1
    %v102 = vadd.f32 %v100, %v101
    %v103 = vsel %vm43, %v95, 0.0
    %v104 = vrot.slane %v103, 4
    %v105 = vadd.f32 %v103, %v104
    %v106 = vrot.slane %v105, 2
    %v107 = vadd.f32 %v105, %v106
    %v108 = vrot.slane %v107, 1
    %v109 = vadd.f32 %v107, %v108
    %v112 = vsel %vm64, %v109, %v102
    %vm114 = vcmask 254976
    %115 = vst.msk [vmem:[#allocation5] sm:$0x3] %vm114, %v112
    %116 = vst.msk [vmem:[#allocation6] sm:$0x3] %vm68, %v79
    // Predicated region
    $region18: #{tpu_custom_call.1} parent=1 // pred_check
      _
    $region19: #{tpu_custom_call.1} parent=1 // pred_check_branch
      %118 = sbr.rel (0) target = $region21
    $region20: #{tpu_custom_call.1} parent=1 // pred_region
      %s120 = ssub.s32 32, 32
      %121 = vsyncadd [#allocation4], %s120
      %s123 = sshll.u32 [#allocation5], 4
      %s124 = int_to_ptr.vmem [resolvable:$true] %s123
      %126 = dma.vmem_to_hbm [thread:$0]  %s124, 32, %s3, [#allocation4]
    $region21: #{tpu_custom_call.1} parent=1 // pred_fallthru
      _
    // Predicated region
    $region22: #{tpu_custom_call.1} parent=1 // pred_check
      _
    $region23: #{tpu_custom_call.1} parent=1 // pred_check_branch
      %128 = sbr.rel (0) target = $region25
    $region24: #{tpu_custom_call.1} parent=1 // pred_region
      %s130 = ssub.s32 32, 32
      %131 = vsyncadd [#allocation7], %s130
      %s133 = sshll.u32 [#allocation6], 4
      %s134 = int_to_ptr.vmem [resolvable:$true] %s133
      %136 = dma.vmem_to_hbm [thread:$0]  %s134, 32, %s4, [#allocation7]
    $region25: #{tpu_custom_call.1} parent=1 // pred_fallthru
      _
    // Predicated region
    $region26: #{tpu_custom_call.1} parent=1 // pred_check
      _
    $region27: #{tpu_custom_call.1} parent=1 // pred_check_branch
      %138 = sbr.rel (0) target = $region29
    $region28: #{tpu_custom_call.1} parent=1 // pred_region
      %139 = dma.done [#allocation4], 32
    $region29: #{tpu_custom_call.1} parent=1 // pred_fallthru
      _
    // Predicated region
    $region30: #{tpu_custom_call.1} parent=1 // pred_check
      _
    $region31: #{tpu_custom_call.1} parent=1 // pred_check_branch
      %141 = sbr.rel (0) target = $region33
    $region32: #{tpu_custom_call.1} parent=1 // pred_region
      %142 = dma.done [#allocation7], 32
    $region33: #{tpu_custom_call.1} parent=1 // pred_fallthru
      _
    %143 = vsyncpa [#allocation3], 1
    %144 = vsyncpa [#allocation4], 1
    %145 = vsyncpa [#allocation7], 1

</llo_original>
